<compile_context>
chip_gen: v7x
topology: tpu7x:2x2x1
jax: 0.10.0
libtpu: 0.0.40
codegen_flags: <defaults>
</compile_context>

<pallas_src>
import functools

import jax
import jax.numpy as jnp
from jax.experimental import pallas as pl
from jax.experimental.pallas import tpu as pltpu

_MIB = 1024 * 1024


def _self_attention_kernel(x_ref, wv_ref, bv_ref, gamma_ref, o_ref, *, col_axis):
    """out = gamma * (x @ Wv + bv) + x   (length-1 softmax == 1 => attn @ V == V)."""
    x = x_ref[...]                                                   # (tile_b, D)
    v = jnp.dot(x, wv_ref[...],
                preferred_element_type=jnp.float32)                  # (tile_b, tile_n)
    v = v + bv_ref[...].astype(jnp.float32)
    gamma = gamma_ref[0]                                             # SMEM scalar

    if col_axis is None:
        x_res = x                                                    # tile_n == D
    else:
        tile_n = o_ref.shape[-1]
        j = pl.program_id(col_axis)
        col0 = pl.multiple_of(j * tile_n, tile_n)
        x_res = x_ref[:, pl.ds(col0, tile_n)]                        # residual columns

    o_ref[...] = (gamma * v + x_res.astype(jnp.float32)).astype(o_ref.dtype)


def _default_vmem_limit():
    """Generation-aware scoped-VMEM budget (v7x: ~56 MiB, v5e/v6e: ~100 MiB)."""
    try:
        cap = pltpu.get_tpu_info().vmem_capacity_bytes
    except Exception:
        cap = 64 * _MIB  # conservative (v7x)
    return int(min(cap - 8 * _MIB, 100 * _MIB))


def self_attention(x, wq, bq, wk, bk, wv, bv, gamma, *,
                   tile_b=None, tile_n=None, batch_outer=None,
                   vmem_limit_bytes=None):
    """Pallas forward of SelfAttention.

    wq/bq/wk/bk are accepted for API parity with the PyTorch module but are
    mathematically dead (softmax over a length-1 sequence == 1.0 exactly), so
    they are never sent to the device kernel.
    """
    del wq, bq, wk, bk  # provably dead path — see module docstring
    B, D = x.shape
    gamma = jnp.asarray(gamma, jnp.float32).reshape((1,))

    # Tiny-shape bypass: pallas_call launch + ~0.35us/step dominates a
    # sub-microsecond problem and a <128 lane output would be masked-store sparse.
    if B < 64 or D < 128:
        v = jnp.dot(x, wv, precision=jax.lax.Precision.HIGHEST) + bv
        return (gamma[0] * v + x).astype(x.dtype)

    xsz = x.dtype.itemsize
    wsz = wv.dtype.itemsize
    osz = xsz

    if vmem_limit_bytes is None:
        vmem_limit_bytes = _default_vmem_limit()
    budget = int(vmem_limit_bytes * 0.9)  # leave compiler headroom

    # ---- choose Wv column tile (tile_n): keep Wv resident when it fits ----
    if tile_n is None:
        min_tb = min(B, 128)
        resident = D * D * wsz + 2 * min_tb * D * xsz + 2 * min_tb * D * osz
        if resident <= budget or D % 128 != 0:
            tile_n = D
        else:
            tile_n = next((c for c in (512, 256, 128) if D % c == 0), D)
    assert D % tile_n == 0, "tile_n must divide D"
    n_tiles = D // tile_n
    col_tiled = n_tiles > 1
    if col_tiled:
        assert tile_n % 128 == 0, "column tile must be lane-aligned (multiple of 128)"
    w_bufs = 2 if col_tiled else 1  # resident Wv/bv -> single-buffered

    # ---- choose batch tile (tile_b) from the VMEM budget + grid-step target ----
    if tile_b is None:
        wv_bytes = w_bufs * (D * tile_n * wsz + tile_n * wsz)
        per_row = 2 * D * xsz + 2 * tile_n * osz        # dbl-buffered x tile + out tile
        fit = max(8, (budget - wv_bytes) // per_row)
        # aim for >= ~8 batch grid steps when B is large (pipeline overlap, 2 TCs on
        # v7x), but never drop below 128 rows per tile.
        step_cap = max(128, (((B + 7) // 8 + 7) // 8) * 8)
        tile_b = min(fit, step_cap, B, 1024)
    tile_b = min(int(tile_b), B)
    if tile_b < B:
        tile_b = max(8, (tile_b // 8) * 8)               # keep sublane-aligned tiles
    nb = pl.cdiv(B, tile_b)

    # ---- grid ordering: re-read whichever operand is cheaper on the inner axis ----
    if batch_outer is None:
        # batch-outer re-reads Wv nb times; column-outer re-reads x n_tiles times.
        batch_outer = (nb * D * D * wsz) <= (n_tiles * B * D * xsz)
    if not col_tiled:
        batch_outer = True

    wv_mode = None if col_tiled else pl.Buffered(1)      # single-buffer resident weights
    if batch_outer:
        grid = (nb, n_tiles)
        x_map = lambda i, j: (i, 0)
        w_map = lambda i, j: (0, j)
        o_map = lambda i, j: (i, j)
        col_axis = 1 if col_tiled else None
    else:
        grid = (n_tiles, nb)
        x_map = lambda j, i: (i, 0)
        w_map = lambda j, i: (0, j)
        o_map = lambda j, i: (i, j)
        col_axis = 0

    def _spec(shape, index_map, mode):
        if mode is None:
            return pl.BlockSpec(shape, index_map)
        return pl.BlockSpec(shape, index_map, pipeline_mode=mode)

    kernel = functools.partial(_self_attention_kernel, col_axis=col_axis)
    return pl.pallas_call(
        kernel,
        out_shape=jax.ShapeDtypeStruct((B, D), x.dtype),
        grid=grid,
        in_specs=[
            _spec((tile_b, D), x_map, None),                     # x tile (full width)
            _spec((D, tile_n), w_map, wv_mode),                  # Wv (resident or col-tiled)
            _spec((1, tile_n), w_map, wv_mode),                  # bv
            pl.BlockSpec(memory_space=pltpu.MemorySpace.SMEM),   # gamma (1,)
        ],
        out_specs=_spec((tile_b, tile_n), o_map, None),
        compiler_params=pltpu.CompilerParams(
            dimension_semantics=("parallel", "parallel"),
            vmem_limit_bytes=int(vmem_limit_bytes),
        ),
    )(x, wv, bv, gamma)


def init_params(key, in_dim):
    """Parameter init mirroring nn.Linear shapes (weights stored as (in, out))."""
    dk = max(1, in_dim // 8)
    kq, kk, kv, kbq, kbk, kbv = jax.random.split(key, 6)
    bound = 1.0 / jnp.sqrt(in_dim)
    wq = jax.random.uniform(kq, (in_dim, dk), jnp.float32, -bound, bound)
    bq = jax.random.uniform(kbq, (1, dk), jnp.float32, -bound, bound)
    wk = jax.random.uniform(kk, (in_dim, dk), jnp.float32, -bound, bound)
    bk = jax.random.uniform(kbk, (1, dk), jnp.float32, -bound, bound)
    wv = jax.random.uniform(kv, (in_dim, in_dim), jnp.float32, -bound, bound)
    bv = jax.random.uniform(kbv, (1, in_dim), jnp.float32, -bound, bound)
    gamma = jnp.zeros((1,), jnp.float32)  # nn.Parameter(torch.zeros(1))
    return wq, bq, wk, bk, wv, bv, gamma


def self_attention_ref(x, wq, bq, wk, bk, wv, bv, gamma):
    """Pure-JAX reference mirroring the full PyTorch forward (incl. Q/K/softmax)."""
    hp = jax.lax.Precision.HIGHEST
    B, D = x.shape
    dk = wq.shape[1]
    Q = (jnp.dot(x, wq, precision=hp) + bq).reshape(B, -1, dk)
    K = (jnp.dot(x, wk, precision=hp) + bk).reshape(B, -1, dk)
    V = (jnp.dot(x, wv, precision=hp) + bv).reshape(B, -1, D)
    scores = jnp.einsum('bqd,bkd->bqk', Q, K, precision=hp) / jnp.sqrt(jnp.float32(dk))
    attn = jax.nn.softmax(scores, axis=-1)
    out = jnp.einsum('bqk,bkd->bqd', attn, V, precision=hp).reshape(B, D)
    return gamma[0] * out + x


if __name__ == "__main__":
    key = jax.random.PRNGKey(0)

    # --- 1) tiny shape consistent with the module (bypass path): batch=8, dim=32 ---
    kx, kp = jax.random.split(key)
    B, D = 8, 32
    x = jax.random.normal(kx, (B, D), jnp.float32)
    wq, bq, wk, bk, wv, bv, _ = init_params(kp, D)
    gamma = jnp.array([0.75], jnp.float32)  # nonzero so the V path is exercised

    y = jax.block_until_ready(self_attention(x, wq, bq, wk, bk, wv, bv, gamma))
    y_ref = self_attention_ref(x, wq, bq, wk, bk, wv, bv, gamma)
    assert jnp.allclose(y, y_ref, atol=1e-5, rtol=1e-5), "mismatch (tiny/bypass)"

    # --- 2) Pallas path, resident (single-buffered) Wv, batch grid > 1 ---
    kx2, kp2 = jax.random.split(jax.random.PRNGKey(1))
    B2, D2 = 256, 256
    x2 = jax.random.normal(kx2, (B2, D2), jnp.float32)
    wq2, bq2, wk2, bk2, wv2, bv2, _ = init_params(kp2, D2)
    gamma2 = jnp.array([0.3], jnp.float32)

    y2 = jax.block_until_ready(
        self_attention(x2, wq2, bq2, wk2, bk2, wv2, bv2, gamma2))
    y2_ref = self_attention_ref(x2, wq2, bq2, wk2, bk2, wv2, bv2, gamma2)
    assert jnp.allclose(y2, y2_ref, atol=1e-4, rtol=1e-4), "mismatch (resident Wv)"

    # --- 3) Pallas path with forced column tiling (large-D code path, batch outer) ---
    y3 = jax.block_until_ready(
        self_attention(x2, wq2, bq2, wk2, bk2, wv2, bv2, gamma2, tile_n=128))
    assert jnp.allclose(y3, y2_ref, atol=1e-4, rtol=1e-4), "mismatch (col-tiled)"

    # --- 4) column tiling with column-outer grid ordering (Wv read once) ---
    y4 = jax.block_until_ready(
        self_attention(x2, wq2, bq2, wk2, bk2, wv2, bv2, gamma2,
                       tile_n=128, batch_outer=False))
    assert jnp.allclose(y4, y2_ref, atol=1e-4, rtol=1e-4), "mismatch (col-outer)"

    print("KERNEL_OK")
</pallas_src>

<mosaic_0001>
module attributes {stable_mosaic.version = 11 : i64} {
  func.func @_self_attention_kernel(%arg0: i32, %arg1: i32, %arg2: memref<128x256xf32, #tpu.memory_space<vmem>>, %arg3: memref<256x256xf32, #tpu.memory_space<vmem>>, %arg4: memref<1x256xf32, #tpu.memory_space<vmem>>, %arg5: memref<1xf32, #tpu.memory_space<smem>>, %arg6: memref<128x256xf32, #tpu.memory_space<vmem>>) attributes {dimension_semantics = [#tpu.dimension_semantics<parallel>, #tpu.dimension_semantics<parallel>], iteration_bounds = array<i64: 2, 1>, scalar_prefetch = 0 : i64, scratch_operands = 0 : i64, tpu.core_type = #tpu.core_type<tc>, window_params = [{transform_indices = @transform_0, window_bounds = array<i64: 128, 256>}, {pipeline_mode = #tpu.pipeline_mode<synchronous>, transform_indices = @transform_1, window_bounds = array<i64: 256, 256>}, {pipeline_mode = #tpu.pipeline_mode<synchronous>, transform_indices = @transform_2, window_bounds = array<i64: 1, 256>}, {transform_indices = @transform_3, window_bounds = array<i64: 1>}, {transform_indices = @transform_4, window_bounds = array<i64: 128, 256>}]} {
    %c0 = arith.constant 0 : index
    %c0_0 = arith.constant 0 : index
    %0 = vector.load %arg2[%c0, %c0_0] : memref<128x256xf32, #tpu.memory_space<vmem>>, vector<128x256xf32>
    %c0_1 = arith.constant 0 : index
    %c0_2 = arith.constant 0 : index
    %1 = vector.load %arg3[%c0_1, %c0_2] : memref<256x256xf32, #tpu.memory_space<vmem>>, vector<256x256xf32>
    %cst = arith.constant dense<0.000000e+00> : vector<128x256xf32>
    %2 = tpu.matmul %0, %1, %cst {dimension_numbers = #tpu.dot_dimension_numbers<[1], [0], [0], [1], [0, 0, 1, 1], [], []>} : vector<128x256xf32>, vector<256x256xf32>, vector<128x256xf32> -> vector<128x256xf32>
    %c0_3 = arith.constant 0 : index
    %c0_4 = arith.constant 0 : index
    %3 = vector.load %arg4[%c0_3, %c0_4] : memref<1x256xf32, #tpu.memory_space<vmem>>, vector<1x256xf32>
    %4 = vector.broadcast %3 : vector<1x256xf32> to vector<128x256xf32>
    %5 = arith.addf %2, %4 : vector<128x256xf32>
    %c0_5 = arith.constant 0 : index
    %6 = memref.load %arg5[%c0_5] : memref<1xf32, #tpu.memory_space<smem>>
    %7 = vector.broadcast %6 : f32 to vector<128x256xf32>
    %8 = arith.mulf %7, %5 : vector<128x256xf32>
    %9 = arith.addf %8, %0 : vector<128x256xf32>
    %c0_6 = arith.constant 0 : index
    %c0_7 = arith.constant 0 : index
    %10 = vector.load %arg6[%c0_6, %c0_7] : memref<128x256xf32, #tpu.memory_space<vmem>>, vector<128x256xf32>
    tpu.vector_store %arg6[%c0_6, %c0_7], %9 {strides = array<i32>} : memref<128x256xf32, #tpu.memory_space<vmem>>, vector<128x256xf32>,
    return
  }
  func.func @transform_0(%arg0: i32, %arg1: i32) -> (i32, i32) {
    %c0_i32 = arith.constant 0 : i32
    %c0_i32_0 = arith.constant 0 : i32
    return %arg0, %c0_i32 : i32, i32
  }
  func.func @transform_1(%arg0: i32, %arg1: i32) -> (i32, i32) {
    %c0_i32 = arith.constant 0 : i32
    %c0_i32_0 = arith.constant 0 : i32
    return %c0_i32, %arg1 : i32, i32
  }
  func.func @transform_2(%arg0: i32, %arg1: i32) -> (i32, i32) {
    %c0_i32 = arith.constant 0 : i32
    %c0_i32_0 = arith.constant 0 : i32
    return %c0_i32, %arg1 : i32, i32
  }
  func.func @transform_3(%arg0: i32, %arg1: i32) -> i32 {
    %c0_i32 = arith.constant 0 : i32
    %c0_i32_0 = arith.constant 0 : i32
    return %c0_i32 : i32
  }
  func.func @transform_4(%arg0: i32, %arg1: i32) -> (i32, i32) {
    %c0_i32 = arith.constant 0 : i32
    return %arg0, %arg1 : i32, i32
  }
}

</mosaic_0001>

<llo_original>
// kernel: tpu_custom_call.1
$region0: #{tpu_custom_call.1}
  #allocation0 [shape = 'u32[]', space=smem, size = 0x4, offset = 0x4, fixed_abs, tag = 'smem constant byte address 0x4 - core index']
  #allocation1 [shape = 'u32[144,128]{1,0:T(1,128)}', space=vmem, size = 0x12000, scoped, tag = 'internal scratch']
  #allocation2 [shape = 'f32[1]{0:T(128)S(6)}', space=smem, size = 0x200, scoped, tag = 'scoped memory for tpu_custom_call.1']
  %s0 = inlined_call_operand.hbm [shape: f32[256,256], index: 0, kind: input, shape index: {}]
  %s1 = inlined_call_operand.hbm [shape: f32[256,256], index: 1, kind: input, shape index: {}]
  %s2 = inlined_call_operand.vmem [shape: f32[1,256], index: 2, kind: input, shape index: {}]
  %s3 = inlined_call_operand.<no memory space> [shape: f32[1], index: 3, kind: input, shape index: {}]
  %s4 = inlined_call_operand.hbm [shape: f32[256,256], index: 4, kind: output, shape index: {}]
  %s5 = sld [smem:[#allocation0]]
  $region57: #{tpu_custom_call.1} parent=0
    _
  %s7 = ssub.s32 1, %s5
  %s8 = scalar_select 0, %s7, %s5
  %9 = sst [smem:[#allocation2]] %s3
  $region1: #{tpu_custom_call.1} parent=0
    #allocation3 [shape = 'u8[262144]{0}', space=vmem, size = 0x40000, scoped, tag = 'input window, operand 0']
    #allocation4 [shape = 's32[2]{0}', space=sflag, size = 0x8, scoped, tag = 'scoped memory for tpu_custom_call.1']
    #allocation5 [shape = 's32[2]{0}', space=sflag, size = 0x8, scoped, tag = 'scoped memory for tpu_custom_call.1']
    #allocation6 [shape = 'u8[262144]{0}', space=vmem, size = 0x40000, scoped, tag = 'input window, operand 1, single buffered']
    #allocation7 [shape = 's32[1]{0}', space=sflag, size = 0x4, scoped, tag = 'scoped memory for tpu_custom_call.1']
    #allocation8 [shape = 'u8[262144]{0}', space=vmem, size = 0x40000, scoped, tag = 'output window, operand 0']
    %10 = vsyncpa [#allocation4], 0
    %s11 = scalar_lea.sflag [#allocation4], 1
    %12 = vsyncpa %s11, 0
    %13 = vsyncpa [#allocation7], 0
    %14 = vsyncpa [#allocation5], 0
    %s15 = scalar_lea.sflag [#allocation5], 1
    %16 = vsyncpa %s15, 0
    loop: start=0, step=1, limit=4
    $region2: #{tpu_custom_call.1} parent=1 // loop_pre_header
      _
    $region3: #{tpu_custom_call.1} parent=1 // loop_header
      %s18 = sphi 0, %s22
      %p19 = scmp.ge.s32.totalorder %s18, 4
      %s25 = sphi 0, %s37
      %s26 = sphi 0, %s33
      %s27 = sphi 0, %s25
      %s28 = sphi 0, %s26
      %s29 = sphi 0, %s27
      %s30 = sphi 0, %s28
      %s40 = sphi 0, %s42
      %s43 = sphi 0, %s40
      %s44 = sphi 0, %s43
      %s60 = sphi 0, %s44
      %s66 = sphi 0, %s68
      %s69 = sphi 0, %s66
      %s70 = sphi 0, %s69
      %s86 = sphi 0, %s70
      %s92 = sphi 0, %s94
      %s95 = sphi 0, %s92
      %s96 = sphi 0, %s95
      %s112 = sphi 0, %s96
      %s116 = sphi 0, %s116
      %s118 = sphi 0, %s116
      %s119 = sphi 0, %s118
      %s133 = sphi 0, %s119
      %s141 = sphi 0, %s143
      %s144 = sphi 0, %s141
      %s145 = sphi 0, %s144
      %s161 = sphi 0, %s145
    $region4: #{tpu_custom_call.1} parent=1 // loop_header_branch
      %21 = sbr.rel (%p19) target = $region8
    $region5: #{tpu_custom_call.1} parent=1 // loop_body
      %s23 = ssub.s32 %s18, 1
      %s24 = ssub.s32 %s18, 2
      %s31 = sadd.s32 1, %s26
      %p32 = scmp.ge.s32.totalorder %s31, 1
      %s33 = scalar_select %p32, 0, %s31
      %s34 = sadd.s32 1, %s25
      %s35 = scalar_select %p32, %s34, %s25
      %p36 = scmp.ge.s32.totalorder %s35, 2
      %s37 = scalar_select %p36, 0, %s35
      %s38 = ssub.s32 %s25, %s37
      %p39 = scmp.eq.s32.totalorder %s38, 0
      %s41 = sadd.s32 %s40, 1
      %s42 = scalar_select %p39, %s40, %s41
      %p45 = pneg %p39
      %p46 = scmp.eq.s32.totalorder %s18, 1
      %p47 = por %p45, %p46
      %p48 = scmp.ne.s32.totalorder %s40, %s43
      %p49 = scmp.eq.s32.totalorder %s18, 0
      %p50 = por %p48, %p49
      %p51 = scmp.ne.s32.totalorder %s40, %s43
      %p52 = scmp.eq.s32.totalorder %s23, 1
      %p53 = por %p51, %p52
      %p54 = scmp.ne.s32.totalorder %s43, %s44
      %p55 = scmp.eq.s32.totalorder %s23, 0
      %p56 = por %p54, %p55
      %p57 = scmp.ne.s32.totalorder %s43, %s44
      %p58 = scmp.eq.s32.totalorder %s24, 1
      %p59 = por %p57, %p58
      %p61 = scmp.ne.s32.totalorder %s44, %s60
      %p62 = scmp.eq.s32.totalorder %s24, 0
      %p63 = por %p61, %p62
      %s64 = ssub.s32 %s26, %s33
      %p65 = scmp.eq.s32.totalorder %s64, 0
      %s67 = sadd.s32 %s66, 1
      %s68 = scalar_select %p65, %s66, %s67
      %p71 = pneg %p65
      %p72 = scmp.eq.s32.totalorder %s18, 1
      %p73 = por %p71, %p72
      %p74 = scmp.ne.s32.totalorder %s66, %s69
      %p75 = scmp.eq.s32.totalorder %s18, 0
      %p76 = por %p74, %p75
      %p77 = scmp.ne.s32.totalorder %s66, %s69
      %p78 = scmp.eq.s32.totalorder %s23, 1
      %p79 = por %p77, %p78
      %p80 = scmp.ne.s32.totalorder %s69, %s70
      %p81 = scmp.eq.s32.totalorder %s23, 0
      %p82 = por %p80, %p81
      %p83 = scmp.ne.s32.totalorder %s69, %s70
      %p84 = scmp.eq.s32.totalorder %s24, 1
      %p85 = por %p83, %p84
      %p87 = scmp.ne.s32.totalorder %s70, %s86
      %p88 = scmp.eq.s32.totalorder %s24, 0
      %p89 = por %p87, %p88
      %s90 = ssub.s32 %s26, %s33
      %p91 = scmp.eq.s32.totalorder %s90, 0
      %s93 = sadd.s32 %s92, 1
      %s94 = scalar_select %p91, %s92, %s93
      %p97 = pneg %p91
      %p98 = scmp.eq.s32.totalorder %s18, 1
      %p99 = por %p97, %p98
      %p100 = scmp.ne.s32.totalorder %s92, %s95
      %p101 = scmp.eq.s32.totalorder %s18, 0
      %p102 = por %p100, %p101
      %p103 = scmp.ne.s32.totalorder %s92, %s95
      %p104 = scmp.eq.s32.totalorder %s23, 1
      %p105 = por %p103, %p104
      %p106 = scmp.ne.s32.totalorder %s95, %s96
      %p107 = scmp.eq.s32.totalorder %s23, 0
      %p108 = por %p106, %p107
      %p109 = scmp.ne.s32.totalorder %s95, %s96
      %p110 = scmp.eq.s32.totalorder %s24, 1
      %p111 = por %p109, %p110
      %p113 = scmp.ne.s32.totalorder %s96, %s112
      %p114 = scmp.eq.s32.totalorder %s24, 0
      %p115 = por %p113, %p114
      %s117 = sadd.s32 %s116, 1
      %p120 = scmp.eq.s32.totalorder %s18, 1
      %p121 = scmp.ne.s32.totalorder %s116, %s118
      %p122 = scmp.eq.s32.totalorder %s18, 0
      %p123 = por %p121, %p122
      %p124 = scmp.ne.s32.totalorder %s116, %s118
      %p125 = scmp.eq.s32.totalorder %s23, 1
      %p126 = por %p124, %p125
      %p127 = scmp.ne.s32.totalorder %s118, %s119
      %p128 = scmp.eq.s32.totalorder %s23, 0
      %p129 = por %p127, %p128
      %p130 = scmp.ne.s32.totalorder %s118, %s119
      %p131 = scmp.eq.s32.totalorder %s24, 1
      %p132 = por %p130, %p131
      %p134 = scmp.ne.s32.totalorder %s119, %s133
      %p135 = scmp.eq.s32.totalorder %s24, 0
      %p136 = por %p134, %p135
      %s137 = ssub.s32 %s25, %s37
      %s138 = ssub.s32 %s26, %s33
      %s139 = sor.u32 %s137, %s138
      %p140 = scmp.eq.s32.totalorder %s139, 0
      %s142 = sadd.s32 %s141, 1
      %s143 = scalar_select %p140, %s141, %s142
      %p146 = pneg %p140
      %p147 = scmp.eq.s32.totalorder %s18, 1
      %p148 = por %p146, %p147
      %p149 = scmp.ne.s32.totalorder %s141, %s144
      %p150 = scmp.eq.s32.totalorder %s18, 0
      %p151 = por %p149, %p150
      %p152 = scmp.ne.s32.totalorder %s141, %s144
      %p153 = scmp.eq.s32.totalorder %s23, 1
      %p154 = por %p152, %p153
      %p155 = scmp.ne.s32.totalorder %s144, %s145
      %p156 = scmp.eq.s32.totalorder %s23, 0
      %p157 = por %p155, %p156
      %p158 = scmp.ne.s32.totalorder %s144, %s145
      %p159 = scmp.eq.s32.totalorder %s24, 1
      %p160 = por %p158, %p159
      %p162 = scmp.ne.s32.totalorder %s145, %s161
      %p163 = scmp.eq.s32.totalorder %s24, 0
      %p164 = por %p162, %p163
      %p165 = scmp.le.s32.totalorder 1, %s18
      %p166 = scmp.lt.s32.totalorder %s18, 3
      %p167 = pnand %p165, %p166
      %p168 = pneg %p167
      // Predicated region
      $region9: #{tpu_custom_call.1} parent=5 // pred_check
        _
      $region10: #{tpu_custom_call.1} parent=5 // pred_check_branch
        %170 = sbr.rel (%p167) target = $region12
      $region11: #{tpu_custom_call.1} parent=5 // pred_region
        %s171 = ssub.s32 %s18, 1
        // Predicated region
        $region13: #{tpu_custom_call.1} parent=11 // pred_check
          %p172 = pneg %p82
        $region14: #{tpu_custom_call.1} parent=11 // pred_check_branch
          %174 = sbr.rel (%p172) target = $region16
        $region15: #{tpu_custom_call.1} parent=11 // pred_region
          %s175 = smul.u32 2, %s28
          %s177 = ssub.s32 8192, 8192
          %178 = vsyncadd [#allocation7], %s177
          %s179 = smul.addr %s175, 128
          %s180 = scalar_lea.hbm %s1, %s179
          %s181 = sshll.u32 [#allocation6], 4
          %s182 = int_to_ptr.vmem [resolvable:$true] %s181
          %187 = dma.hbm_to_vmem [thread:$0]  %s180, 8192, %s182, [#allocation7], 256, 256, 16
        $region16: #{tpu_custom_call.1} parent=11 // pred_fallthru
          _
        // Predicated region
        $region17: #{tpu_custom_call.1} parent=11 // pred_check
          %p188 = pneg %p108
        $region18: #{tpu_custom_call.1} parent=11 // pred_check_branch
          %190 = sbr.rel (%p188) target = $region20
        $region19: #{tpu_custom_call.1} parent=11 // pred_region
          %s191 = smul.u32 2, %s28
          %p192 = scmp.lt.s32.totalorder %s191, 1
          %s193 = scalar_select %p192, %s191, 1
          %s194 = scalar_lea.vmem %s2, %s193
          %s195 = smul.u32 2, %s28
        $region20: #{tpu_custom_call.1} parent=11 // pred_fallthru
          _
        // Predicated region
        $region21: #{tpu_custom_call.1} parent=11 // pred_check
          %p196 = pneg %p129
        $region22: #{tpu_custom_call.1} parent=11 // pred_check_branch
          %198 = sbr.rel (%p196) target = $region24
        $region23: #{tpu_custom_call.1} parent=11 // pred_region
          _
        $region24: #{tpu_custom_call.1} parent=11 // pred_fallthru
          _
      $region12: #{tpu_custom_call.1} parent=5 // pred_fallthru
        _
      %p199 = scmp.lt.s32.totalorder %s18, 2
      // Predicated region
      $region25: #{tpu_custom_call.1} parent=5 // pred_check
        %p200 = pneg %p199
      $region26: #{tpu_custom_call.1} parent=5 // pred_check_branch
        %202 = sbr.rel (%p200) target = $region28
      $region27: #{tpu_custom_call.1} parent=5 // pred_region
        // Predicated region
        $region29: #{tpu_custom_call.1} parent=27 // pred_check
          %p203 = pneg %p50
        $region30: #{tpu_custom_call.1} parent=27 // pred_check_branch
          %205 = sbr.rel (%p203) target = $region32
        $region31: #{tpu_custom_call.1} parent=27 // pred_region
          %s206 = sand.u32 %s40, 1
          %s207 = scalar_lea.sflag [#allocation4], %s206
          %s208 = sand.u32 %s40, 1
          %s209 = smul.addr %s208, 256
          %s210 = scalar_lea.vmem [#allocation3], %s209
          %s211 = smul.u32 16, %s25
          %s213 = ssub.s32 4096, 4096
          %214 = vsyncadd %s207, %s213
          %s215 = smul.addr %s211, 2
          %s216 = smul.addr %s215, 128
          %s217 = scalar_lea.hbm %s0, %s216
          %s218 = sshll.u32 %s210, 4
          %s219 = int_to_ptr.vmem [resolvable:$true] %s218
          %224 = dma.hbm_to_vmem [thread:$0]  %s217, 4096, %s219, %s207, 256, 256, 16
        $region32: #{tpu_custom_call.1} parent=27 // pred_fallthru
          _
      $region28: #{tpu_custom_call.1} parent=5 // pred_fallthru
        _
      %p225 = scmp.le.s32.totalorder 1, %s18
      %p226 = scmp.lt.s32.totalorder %s18, 3
      %p227 = pnand %p225, %p226
      %p228 = pneg %p227
      // Predicated region
      $region33: #{tpu_custom_call.1} parent=5 // pred_check
        _
      $region34: #{tpu_custom_call.1} parent=5 // pred_check_branch
        %230 = sbr.rel (%p227) target = $region36
      $region35: #{tpu_custom_call.1} parent=5 // pred_region
        %s231 = ssub.s32 %s18, 1
        %s232 = sand.u32 %s43, 1
        %s233 = scalar_lea.sflag [#allocation4], %s232
        %s234 = sand.u32 %s43, 1
        %s235 = smul.addr %s234, 256
        %s236 = scalar_lea.vmem [#allocation3], %s235
        // Predicated region
        $region37: #{tpu_custom_call.1} parent=35 // pred_check
          %p237 = pneg %p56
        $region38: #{tpu_custom_call.1} parent=35 // pred_check_branch
          %239 = sbr.rel (%p237) target = $region40
        $region39: #{tpu_custom_call.1} parent=35 // pred_region
          %240 = dma.done %s233, 4096
        $region40: #{tpu_custom_call.1} parent=35 // pred_fallthru
          _
        // Predicated region
        $region41: #{tpu_custom_call.1} parent=35 // pred_check
          %p241 = pneg %p82
        $region42: #{tpu_custom_call.1} parent=35 // pred_check_branch
          %243 = sbr.rel (%p241) target = $region44
        $region43: #{tpu_custom_call.1} parent=35 // pred_region
          %244 = dma.done [#allocation7], 8192
        $region44: #{tpu_custom_call.1} parent=35 // pred_fallthru
          _
        %s245 = sand.u32 %s43, 1
        %s246 = scalar_lea.sflag [#allocation4], %s245
        %s247 = sand.u32 %s43, 1
        %s248 = smul.addr %s247, 256
        %s249 = scalar_lea.vmem [#allocation3], %s248
        %p250 = pneg %p56
        %p251 = pneg %p53
        %p252 = pneg %p82
        %p253 = pneg %p79
        %s254 = smul.u32 2, %s28
        %p255 = scmp.lt.s32.totalorder %s254, 1
        %s256 = scalar_select %p255, %s254, 1
        %s257 = scalar_lea.vmem %s2, %s256
        %p258 = pneg %p108
        %p259 = pneg %p105
        %p260 = pneg %p129
        %p261 = pneg %p126
        %p262 = pneg %p157
        %p263 = pneg %p154
        %s264 = sand.u32 %s144, 1
        %s265 = scalar_lea.sflag [#allocation5], %s264
        %s266 = sand.u32 %s144, 1
        %s267 = smul.addr %s266, 256
        %s268 = scalar_lea.vmem [#allocation8], %s267
        %s269 = smul.u32 16, %s27
        %s270 = smul.u32 2, %s28
        %s271 = smul.u32 2, %s28
        %p272 = scmp.lt.s32.totalorder %s271, 1
        %s273 = scalar_select %p272, %s271, 1
        %s274 = scalar_lea.vmem %s2, %s273
        %s275 = smul.u32 2, %s28
        %s276 = smul.u32 16, %s27
        %s277 = smul.u32 2, %s28
        %v278 = vld [vmem:[%s236] sm:$0xff]
        %v279 = vld [vmem:[%s236 + $0x8] sm:$0xff]
        %v280 = vld [vmem:[%s236 + $0x10] sm:$0xff]
        %v281 = vld [vmem:[%s236 + $0x18] sm:$0xff]
        %v282 = vld [vmem:[%s236 + $0x20] sm:$0xff]
        %v283 = vld [vmem:[%s236 + $0x28] sm:$0xff]
        %v284 = vld [vmem:[%s236 + $0x30] sm:$0xff]
        %v285 = vld [vmem:[%s236 + $0x38] sm:$0xff]
        %v286 = vld [vmem:[%s236 + $0x40] sm:$0xff]
        %v287 = vld [vmem:[%s236 + $0x48] sm:$0xff]
        %v288 = vld [vmem:[%s236 + $0x50] sm:$0xff]
        %v289 = vld [vmem:[%s236 + $0x58] sm:$0xff]
        %v290 = vld [vmem:[%s236 + $0x60] sm:$0xff]
        %v291 = vld [vmem:[%s236 + $0x68] sm:$0xff]
        %v292 = vld [vmem:[%s236 + $0x70] sm:$0xff]
        %v293 = vld [vmem:[%s236 + $0x78] sm:$0xff]
        %v294 = vld [vmem:[%s236 + $0x80] sm:$0xff]
        %v295 = vld [vmem:[%s236 + $0x88] sm:$0xff]
        %v296 = vld [vmem:[%s236 + $0x90] sm:$0xff]
        %v297 = vld [vmem:[%s236 + $0x98] sm:$0xff]
        %v298 = vld [vmem:[%s236 + $0xa0] sm:$0xff]
        %v299 = vld [vmem:[%s236 + $0xa8] sm:$0xff]
        %v300 = vld [vmem:[%s236 + $0xb0] sm:$0xff]
        %v301 = vld [vmem:[%s236 + $0xb8] sm:$0xff]
        %v302 = vld [vmem:[%s236 + $0xc0] sm:$0xff]
        %v303 = vld [vmem:[%s236 + $0xc8] sm:$0xff]
        %v304 = vld [vmem:[%s236 + $0xd0] sm:$0xff]
        %v305 = vld [vmem:[%s236 + $0xd8] sm:$0xff]
        %v306 = vld [vmem:[%s236 + $0xe0] sm:$0xff]
        %v307 = vld [vmem:[%s236 + $0xe8] sm:$0xff]
        %v308 = vld [vmem:[%s236 + $0xf0] sm:$0xff]
        %v309 = vld [vmem:[%s236 + $0xf8] sm:$0xff]
        %v310 = vld [vmem:[#allocation6] sm:$0xff]
        %v311 = vld [vmem:[#allocation6 + $0x8] sm:$0xff]
        %v312 = vld [vmem:[#allocation6 + $0x10] sm:$0xff]
        %v313 = vld [vmem:[#allocation6 + $0x18] sm:$0xff]
        %v314 = vld [vmem:[#allocation6 + $0x20] sm:$0xff]
        %v315 = vld [vmem:[#allocation6 + $0x28] sm:$0xff]
        %v316 = vld [vmem:[#allocation6 + $0x30] sm:$0xff]
        %v317 = vld [vmem:[#allocation6 + $0x38] sm:$0xff]
        %v318 = vld [vmem:[#allocation6 + $0x40] sm:$0xff]
        %v319 = vld [vmem:[#allocation6 + $0x48] sm:$0xff]
        %v320 = vld [vmem:[#allocation6 + $0x50] sm:$0xff]
        %v321 = vld [vmem:[#allocation6 + $0x58] sm:$0xff]
        %v322 = vld [vmem:[#allocation6 + $0x60] sm:$0xff]
        %v323 = vld [vmem:[#allocation6 + $0x68] sm:$0xff]
        %v324 = vld [vmem:[#allocation6 + $0x70] sm:$0xff]
        %v325 = vld [vmem:[#allocation6 + $0x78] sm:$0xff]
        %v326 = vld [vmem:[#allocation6 + $0x80] sm:$0xff]
        %v327 = vld [vmem:[#allocation6 + $0x88] sm:$0xff]
        %v328 = vld [vmem:[#allocation6 + $0x90] sm:$0xff]
        %v329 = vld [vmem:[#allocation6 + $0x98] sm:$0xff]
        %v330 = vld [vmem:[#allocation6 + $0xa0] sm:$0xff]
        %v331 = vld [vmem:[#allocation6 + $0xa8] sm:$0xff]
        %v332 = vld [vmem:[#allocation6 + $0xb0] sm:$0xff]
        %v333 = vld [vmem:[#allocation6 + $0xb8] sm:$0xff]
        %v334 = vld [vmem:[#allocation6 + $0xc0] sm:$0xff]
        %v335 = vld [vmem:[#allocation6 + $0xc8] sm:$0xff]
        %v336 = vld [vmem:[#allocation6 + $0xd0] sm:$0xff]
        %v337 = vld [vmem:[#allocation6 + $0xd8] sm:$0xff]
        %v338 = vld [vmem:[#allocation6 + $0xe0] sm:$0xff]
        %v339 = vld [vmem:[#allocation6 + $0xe8] sm:$0xff]
        %v340 = vld [vmem:[#allocation6 + $0xf0] sm:$0xff]
        %v341 = vld [vmem:[#allocation6 + $0xf8] sm:$0xff]
        %v342 = vld [vmem:[#allocation6 + $0x100] sm:$0xff]
        %v343 = vld [vmem:[#allocation6 + $0x108] sm:$0xff]
        %v344 = vld [vmem:[#allocation6 + $0x110] sm:$0xff]
        %v345 = vld [vmem:[#allocation6 + $0x118] sm:$0xff]
        %v346 = vld [vmem:[#allocation6 + $0x120] sm:$0xff]
        %v347 = vld [vmem:[#allocation6 + $0x128] sm:$0xff]
        %v348 = vld [vmem:[#allocation6 + $0x130] sm:$0xff]
        %v349 = vld [vmem:[#allocation6 + $0x138] sm:$0xff]
        %v350 = vld [vmem:[#allocation6 + $0x140] sm:$0xff]
        %v351 = vld [vmem:[#allocation6 + $0x148] sm:$0xff]
        %v352 = vld [vmem:[#allocation6 + $0x150] sm:$0xff]
        %v353 = vld [vmem:[#allocation6 + $0x158] sm:$0xff]
        %v354 = vld [vmem:[#allocation6 + $0x160] sm:$0xff]
        %v355 = vld [vmem:[#allocation6 + $0x168] sm:$0xff]
        %v356 = vld [vmem:[#allocation6 + $0x170] sm:$0xff]
        %v357 = vld [vmem:[#allocation6 + $0x178] sm:$0xff]
        %v358 = vld [vmem:[#allocation6 + $0x180] sm:$0xff]
        %v359 = vld [vmem:[#allocation6 + $0x188] sm:$0xff]
        %v360 = vld [vmem:[#allocation6 + $0x190] sm:$0xff]
        %v361 = vld [vmem:[#allocation6 + $0x198] sm:$0xff]
        %v362 = vld [vmem:[#allocation6 + $0x1a0] sm:$0xff]
        %v363 = vld [vmem:[#allocation6 + $0x1a8] sm:$0xff]
        %v364 = vld [vmem:[#allocation6 + $0x1b0] sm:$0xff]
        %v365 = vld [vmem:[#allocation6 + $0x1b8] sm:$0xff]
        %v366 = vld [vmem:[#allocation6 + $0x1c0] sm:$0xff]
        %v367 = vld [vmem:[#allocation6 + $0x1c8] sm:$0xff]
        %v368 = vld [vmem:[#allocation6 + $0x1d0] sm:$0xff]
        %v369 = vld [vmem:[#allocation6 + $0x1d8] sm:$0xff]
        %v370 = vld [vmem:[#allocation6 + $0x1e0] sm:$0xff]
        %v371 = vld [vmem:[#allocation6 + $0x1e8] sm:$0xff]
        %v372 = vld [vmem:[#allocation6 + $0x1f0] sm:$0xff]
        %v373 = vld [vmem:[#allocation6 + $0x1f8] sm:$0xff]
        %v374 = vld [vmem:[%s274] sm:$0x3]
        %v376 = vlaneseq
        %v377 = vshrl.u32 %v376, 7
        %v378 = vsub.s32 0, %v377
        %v379 = vrot.slane %v374, %v378
        %v380 = vlaneseq
        %v381 = vshrl.u32 %v380, 7
        %v382 = vsub.s32 1, %v381
        %v383 = vrot.slane %v374, %v382
        %386 = vmatprep.subr.mxu0 %v311
        %387 = vmatpush1.msra.mxu0 %v310
        %388 = vmatprep.subr.mxu0 %v313
        %389 = vmatpush1.msra.mxu0 %v312
        %390 = vmatprep.subr.mxu0 %v315
        %391 = vmatpush1.msra.mxu0 %v314
        %392 = vmatprep.subr.mxu0 %v317
        %393 = vmatpush1.msra.mxu0 %v316
        %394 = vmatprep.subr.mxu0 %v319
        %395 = vmatpush1.msra.mxu0 %v318
        %396 = vmatprep.subr.mxu0 %v321
        %397 = vmatpush1.msra.mxu0 %v320
        %398 = vmatprep.subr.mxu0 %v323
        %399 = vmatpush1.msra.mxu0 %v322
        %400 = vmatprep.subr.mxu0 %v325
        %401 = vmatpush1.msra.mxu0 %v324
        %402 = vmatprep.subr.mxu0 %v327
        %403 = vmatpush1.msra.mxu0 %v326
        %404 = vmatprep.subr.mxu0 %v329
        %405 = vmatpush1.msra.mxu0 %v328
        %406 = vmatprep.subr.mxu0 %v331
        %407 = vmatpush1.msra.mxu0 %v330
        %408 = vmatprep.subr.mxu0 %v333
        %409 = vmatpush1.msra.mxu0 %v332
        %410 = vmatprep.subr.mxu0 %v335
        %411 = vmatpush1.msra.mxu0 %v334
        %412 = vmatprep.subr.mxu0 %v337
        %413 = vmatpush1.msra.mxu0 %v336
        %414 = vmatprep.subr.mxu0 %v339
        %415 = vmatpush1.msra.mxu0 %v338
        %416 = vmatprep.subr.mxu0 %v341
        %417 = vmatpush1.msra.mxu0 %v340
        %418 = vmatprep.subr.mxu0 %v343
        %419 = vmatpush1.msra.mxu0 %v342
        %420 = vmatprep.subr.mxu0 %v345
        %421 = vmatpush1.msra.mxu0 %v344
        %422 = vmatprep.subr.mxu0 %v347
        %423 = vmatpush1.msra.mxu0 %v346
        %424 = vmatprep.subr.mxu0 %v349
        %425 = vmatpush1.msra.mxu0 %v348
        %426 = vmatprep.subr.mxu0 %v351
        %427 = vmatpush1.msra.mxu0 %v350
        %428 = vmatprep.subr.mxu0 %v353
        %429 = vmatpush1.msra.mxu0 %v352
        %430 = vmatprep.subr.mxu0 %v355
        %431 = vmatpush1.msra.mxu0 %v354
        %432 = vmatprep.subr.mxu0 %v357
        %433 = vmatpush1.msra.mxu0 %v356
        %434 = vmatprep.subr.mxu0 %v359
        %435 = vmatpush1.msra.mxu0 %v358
        %436 = vmatprep.subr.mxu0 %v361
        %437 = vmatpush1.msra.mxu0 %v360
        %438 = vmatprep.subr.mxu0 %v363
        %439 = vmatpush1.msra.mxu0 %v362
        %440 = vmatprep.subr.mxu0 %v365
        %441 = vmatpush1.msra.mxu0 %v364
        %442 = vmatprep.subr.mxu0 %v367
        %443 = vmatpush1.msra.mxu0 %v366
        %444 = vmatprep.subr.mxu0 %v369
        %445 = vmatpush1.msra.mxu0 %v368
        %446 = vmatprep.subr.mxu0 %v371
        %447 = vmatpush1.msra.mxu0 %v370
        %448 = vmatprep.subr.mxu0 %v373
        %449 = vmatpush1.msra.mxu0 %v372
        %450 = vmatprep.mubr.f32.mxu0 %v279
        %451 = vmatmul.mubr.f32.gmra.mrb[0].mxu0 %v278
        %v452 = vpop.f32.mrb[0].mxu0
        %v453 = vadd.f32 %v379, %v452
        %v454 = vpop.f32.mrb[0].mxu0
        %v455 = vadd.f32 %v383, %v454
        %456 = vmatprep.mubr.f32.mxu0 %v281
        %457 = vmatmul.mubr.f32.gmra.mrb[0].mxu0 %v280
        %v458 = vpop.f32.mrb[0].mxu0
        %v459 = vadd.f32 %v379, %v458
        %v460 = vpop.f32.mrb[0].mxu0
        %v461 = vadd.f32 %v383, %v460
        %462 = vmatprep.mubr.f32.mxu0 %v283
        %463 = vmatmul.mubr.f32.gmra.mrb[0].mxu0 %v282
        %v464 = vpop.f32.mrb[0].mxu0
        %v465 = vadd.f32 %v379, %v464
        %v466 = vpop.f32.mrb[0].mxu0
        %v467 = vadd.f32 %v383, %v466
        %468 = vmatprep.mubr.f32.mxu0 %v285
        %469 = vmatmul.mubr.f32.gmra.mrb[0].mxu0 %v284
        %v470 = vpop.f32.mrb[0].mxu0
        %v471 = vadd.f32 %v379, %v470
        %v472 = vpop.f32.mrb[0].mxu0
        %v473 = vadd.f32 %v383, %v472
        %474 = vmatprep.mubr.f32.mxu0 %v287
        %475 = vmatmul.mubr.f32.gmra.mrb[0].mxu0 %v286
        %v476 = vpop.f32.mrb[0].mxu0
        %v477 = vadd.f32 %v379, %v476
        %v478 = vpop.f32.mrb[0].mxu0
        %v479 = vadd.f32 %v383, %v478
        %480 = vmatprep.mubr.f32.mxu0 %v289
        %481 = vmatmul.mubr.f32.gmra.mrb[0].mxu0 %v288
        %v482 = vpop.f32.mrb[0].mxu0
        %v483 = vadd.f32 %v379, %v482
        %v484 = vpop.f32.mrb[0].mxu0
        %v485 = vadd.f32 %v383, %v484
        %486 = vmatprep.mubr.f32.mxu0 %v291
        %487 = vmatmul.mubr.f32.gmra.mrb[0].mxu0 %v290
        %v488 = vpop.f32.mrb[0].mxu0
        %v489 = vadd.f32 %v379, %v488
        %v490 = vpop.f32.mrb[0].mxu0
        %v491 = vadd.f32 %v383, %v490
        %492 = vmatprep.mubr.f32.mxu0 %v293
        %493 = vmatmul.mubr.f32.gmra.mrb[0].mxu0 %v292
        %v494 = vpop.f32.mrb[0].mxu0
        %v495 = vadd.f32 %v379, %v494
        %v496 = vpop.f32.mrb[0].mxu0
        %v497 = vadd.f32 %v383, %v496
        %498 = vmatprep.mubr.f32.mxu0 %v295
        %499 = vmatmul.mubr.f32.gmra.mrb[0].mxu0 %v294
        %v500 = vpop.f32.mrb[0].mxu0
        %v501 = vadd.f32 %v379, %v500
        %v502 = vpop.f32.mrb[0].mxu0
        %v503 = vadd.f32 %v383, %v502
        %504 = vmatprep.mubr.f32.mxu0 %v297
        %505 = vmatmul.mubr.f32.gmra.mrb[0].mxu0 %v296
        %v506 = vpop.f32.mrb[0].mxu0
        %v507 = vadd.f32 %v379, %v506
        %v508 = vpop.f32.mrb[0].mxu0
        %v509 = vadd.f32 %v383, %v508
        %510 = vmatprep.mubr.f32.mxu0 %v299
        %511 = vmatmul.mubr.f32.gmra.mrb[0].mxu0 %v298
        %v512 = vpop.f32.mrb[0].mxu0
        %v513 = vadd.f32 %v379, %v512
        %v514 = vpop.f32.mrb[0].mxu0
        %v515 = vadd.f32 %v383, %v514
        %516 = vmatprep.mubr.f32.mxu0 %v301
        %517 = vmatmul.mubr.f32.gmra.mrb[0].mxu0 %v300
        %v518 = vpop.f32.mrb[0].mxu0
        %v519 = vadd.f32 %v379, %v518
        %v520 = vpop.f32.mrb[0].mxu0
        %v521 = vadd.f32 %v383, %v520
        %522 = vmatprep.mubr.f32.mxu0 %v303
        %523 = vmatmul.mubr.f32.gmra.mrb[0].mxu0 %v302
        %v524 = vpop.f32.mrb[0].mxu0
        %v525 = vadd.f32 %v379, %v524
        %v526 = vpop.f32.mrb[0].mxu0
        %v527 = vadd.f32 %v383, %v526
        %528 = vmatprep.mubr.f32.mxu0 %v305
        %529 = vmatmul.mubr.f32.gmra.mrb[0].mxu0 %v304
        %v530 = vpop.f32.mrb[0].mxu0
        %v531 = vadd.f32 %v379, %v530
        %v532 = vpop.f32.mrb[0].mxu0
        %v533 = vadd.f32 %v383, %v532
        %534 = vmatprep.mubr.f32.mxu0 %v307
        %535 = vmatmul.mubr.f32.gmra.mrb[0].mxu0 %v306
        %v536 = vpop.f32.mrb[0].mxu0
        %v537 = vadd.f32 %v379, %v536
        %v538 = vpop.f32.mrb[0].mxu0
        %v539 = vadd.f32 %v383, %v538
        %540 = vmatprep.mubr.f32.mxu0 %v309
        %541 = vmatmul.mubr.f32.gmra.mrb[0].mxu0 %v308
        %v542 = vpop.f32.mrb[0].mxu0
        %v543 = vadd.f32 %v379, %v542
        %v544 = vpop.f32.mrb[0].mxu0
        %v545 = vadd.f32 %v383, %v544
        %546 = vdwg.mxu0
        %s547 = sld [smem:[#allocation2]]
        %v548 = vstv %s547
        %v549 = vmul.f32 %v548, %v453
        %v550 = vmul.f32 %v548, %v455
        %v551 = vmul.f32 %v548, %v459
        %v552 = vmul.f32 %v548, %v461
        %v553 = vmul.f32 %v548, %v465
        %v554 = vmul.f32 %v548, %v467
        %v555 = vmul.f32 %v548, %v471
        %v556 = vmul.f32 %v548, %v473
        %v557 = vmul.f32 %v548, %v477
        %v558 = vmul.f32 %v548, %v479
        %v559 = vmul.f32 %v548, %v483
        %v560 = vmul.f32 %v548, %v485
        %v561 = vmul.f32 %v548, %v489
        %v562 = vmul.f32 %v548, %v491
        %v563 = vmul.f32 %v548, %v495
        %v564 = vmul.f32 %v548, %v497
        %v565 = vmul.f32 %v548, %v501
        %v566 = vmul.f32 %v548, %v503
        %v567 = vmul.f32 %v548, %v507
        %v568 = vmul.f32 %v548, %v509
        %v569 = vmul.f32 %v548, %v513
        %v570 = vmul.f32 %v548, %v515
        %v571 = vmul.f32 %v548, %v519
        %v572 = vmul.f32 %v548, %v521
        %v573 = vmul.f32 %v548, %v525
        %v574 = vmul.f32 %v548, %v527
        %v575 = vmul.f32 %v548, %v531
        %v576 = vmul.f32 %v548, %v533
        %v577 = vmul.f32 %v548, %v537
        %v578 = vmul.f32 %v548, %v539
        %v579 = vmul.f32 %v548, %v543
        %v580 = vmul.f32 %v548, %v545
        %v581 = vadd.f32 %v549, %v278
        %v582 = vadd.f32 %v550, %v279
        %v583 = vadd.f32 %v551, %v280
        %v584 = vadd.f32 %v552, %v281
        %v585 = vadd.f32 %v553, %v282
        %v586 = vadd.f32 %v554, %v283
        %v587 = vadd.f32 %v555, %v284
        %v588 = vadd.f32 %v556, %v285
        %v589 = vadd.f32 %v557, %v286
        %v590 = vadd.f32 %v558, %v287
        %v591 = vadd.f32 %v559, %v288
        %v592 = vadd.f32 %v560, %v289
        %v593 = vadd.f32 %v561, %v290
        %v594 = vadd.f32 %v562, %v291
        %v595 = vadd.f32 %v563, %v292
        %v596 = vadd.f32 %v564, %v293
        %v597 = vadd.f32 %v565, %v294
        %v598 = vadd.f32 %v566, %v295
        %v599 = vadd.f32 %v567, %v296
        %v600 = vadd.f32 %v568, %v297
        %v601 = vadd.f32 %v569, %v298
        %v602 = vadd.f32 %v570, %v299
        %v603 = vadd.f32 %v571, %v300
        %v604 = vadd.f32 %v572, %v301
        %v605 = vadd.f32 %v573, %v302
        %v606 = vadd.f32 %v574, %v303
        %v607 = vadd.f32 %v575, %v304
        %v608 = vadd.f32 %v576, %v305
        %v609 = vadd.f32 %v577, %v306
        %v610 = vadd.f32 %v578, %v307
        %v611 = vadd.f32 %v579, %v308
        %v612 = vadd.f32 %v580, %v309
        %613 = vst [vmem:[%s268] sm:$0xff] %v581
        %614 = vst [vmem:[%s268 + $0x8] sm:$0xff] %v582
        %615 = vst [vmem:[%s268 + $0x10] sm:$0xff] %v583
        %616 = vst [vmem:[%s268 + $0x18] sm:$0xff] %v584
        %617 = vst [vmem:[%s268 + $0x20] sm:$0xff] %v585
        %618 = vst [vmem:[%s268 + $0x28] sm:$0xff] %v586
        %619 = vst [vmem:[%s268 + $0x30] sm:$0xff] %v587
        %620 = vst [vmem:[%s268 + $0x38] sm:$0xff] %v588
        %621 = vst [vmem:[%s268 + $0x40] sm:$0xff] %v589
        %622 = vst [vmem:[%s268 + $0x48] sm:$0xff] %v590
        %623 = vst [vmem:[%s268 + $0x50] sm:$0xff] %v591
        %624 = vst [vmem:[%s268 + $0x58] sm:$0xff] %v592
        %625 = vst [vmem:[%s268 + $0x60] sm:$0xff] %v593
        %626 = vst [vmem:[%s268 + $0x68] sm:$0xff] %v594
        %627 = vst [vmem:[%s268 + $0x70] sm:$0xff] %v595
        %628 = vst [vmem:[%s268 + $0x78] sm:$0xff] %v596
        %629 = vst [vmem:[%s268 + $0x80] sm:$0xff] %v597
        %630 = vst [vmem:[%s268 + $0x88] sm:$0xff] %v598
        %631 = vst [vmem:[%s268 + $0x90] sm:$0xff] %v599
        %632 = vst [vmem:[%s268 + $0x98] sm:$0xff] %v600
        %633 = vst [vmem:[%s268 + $0xa0] sm:$0xff] %v601
        %634 = vst [vmem:[%s268 + $0xa8] sm:$0xff] %v602
        %635 = vst [vmem:[%s268 + $0xb0] sm:$0xff] %v603
        %636 = vst [vmem:[%s268 + $0xb8] sm:$0xff] %v604
        %637 = vst [vmem:[%s268 + $0xc0] sm:$0xff] %v605
        %638 = vst [vmem:[%s268 + $0xc8] sm:$0xff] %v606
        %639 = vst [vmem:[%s268 + $0xd0] sm:$0xff] %v607
        %640 = vst [vmem:[%s268 + $0xd8] sm:$0xff] %v608
        %641 = vst [vmem:[%s268 + $0xe0] sm:$0xff] %v609
        %642 = vst [vmem:[%s268 + $0xe8] sm:$0xff] %v610
        %643 = vst [vmem:[%s268 + $0xf0] sm:$0xff] %v611
        %644 = vst [vmem:[%s268 + $0xf8] sm:$0xff] %v612
        %s645 = sand.u32 %s144, 1
        %s646 = scalar_lea.sflag [#allocation5], %s645
        %s647 = sand.u32 %s144, 1
        %s648 = smul.addr %s647, 256
        %s649 = scalar_lea.vmem [#allocation8], %s648
        // Predicated region
        $region45: #{tpu_custom_call.1} parent=35 // pred_check
          %p650 = pneg %p154
        $region46: #{tpu_custom_call.1} parent=35 // pred_check_branch
          %652 = sbr.rel (%p650) target = $region48
        $region47: #{tpu_custom_call.1} parent=35 // pred_region
          %s653 = smul.u32 16, %s27
          %s654 = smul.u32 2, %s28
          %s656 = ssub.s32 4096, 4096
          %657 = vsyncadd %s646, %s656
          %s658 = smul.addr %s653, 2
          %s659 = sadd.s32 %s654, %s658
          %s660 = smul.addr %s659, 128
          %s661 = scalar_lea.hbm %s4, %s660
          %s662 = sshll.u32 %s649, 4
          %s663 = int_to_ptr.vmem [resolvable:$true] %s662
          %668 = dma.vmem_to_hbm [thread:$0]  %s663, 4096, %s661, %s646, 256, 256, 16
        $region48: #{tpu_custom_call.1} parent=35 // pred_fallthru
          _
      $region36: #{tpu_custom_call.1} parent=5 // pred_fallthru
        _
      %p669 = scmp.le.s32.totalorder 2, %s18
      // Predicated region
      $region49: #{tpu_custom_call.1} parent=5 // pred_check
        %p670 = pneg %p669
      $region50: #{tpu_custom_call.1} parent=5 // pred_check_branch
        %672 = sbr.rel (%p670) target = $region52
      $region51: #{tpu_custom_call.1} parent=5 // pred_region
        %s673 = ssub.s32 %s18, 2
        // Predicated region
        $region53: #{tpu_custom_call.1} parent=51 // pred_check
          %p674 = pneg %p160
        $region54: #{tpu_custom_call.1} parent=51 // pred_check_branch
          %676 = sbr.rel (%p674) target = $region56
        $region55: #{tpu_custom_call.1} parent=51 // pred_region
          %s677 = sand.u32 %s145, 1
          %s678 = scalar_lea.sflag [#allocation5], %s677
          %s679 = sand.u32 %s145, 1
          %s680 = smul.addr %s679, 256
          %s681 = scalar_lea.vmem [#allocation8], %s680
          %682 = dma.done %s678, 4096
        $region56: #{tpu_custom_call.1} parent=51 // pred_fallthru
          _
      $region52: #{tpu_custom_call.1} parent=5 // pred_fallthru
        _
    $region6: #{tpu_custom_call.1} parent=1 // loop_footer
      %s22 = sadd.s32 1, %s18
    $region7: #{tpu_custom_call.1} parent=1 // loop_footer_branch
      %17 = sbr.rel target = $region3
    $region8: #{tpu_custom_call.1} parent=1 // loop_exit
      _
    %683 = vsyncpa [#allocation4], 1
    %s684 = scalar_lea.sflag [#allocation4], 1
    %685 = vsyncpa %s684, 1
    %686 = vsyncpa [#allocation7], 1
    %687 = vsyncpa [#allocation5], 1
    %s688 = scalar_lea.sflag [#allocation5], 1
    %689 = vsyncpa %s688, 1

</llo_original>
